<compile_context>
chip_gen: v7x
topology: tpu7x:2x2x1
jax: 0.10.0
libtpu: 0.0.40
codegen_flags: <defaults>
</compile_context>

<pallas_src>
import jax
import jax.numpy as jnp
from jax.experimental import pallas as pl
from jax.experimental.pallas import tpu as pltpu


# ---------------------------------------------------------------------------
# DyDiT helpers
# ---------------------------------------------------------------------------
def round_to_nearest(input_size, width_mult, num_heads, min_value=1):
    """Mirror of DyDiT round_to_nearest (used by DynaLinear width scaling)."""
    new_width_mult = round(num_heads * width_mult) * 1.0 / num_heads
    input_size = int(new_width_mult * input_size)
    return max(min_value, input_size)


def _round_up(x, m):
    return ((x + m - 1) // m) * m


# ---------------------------------------------------------------------------
# In-kernel exact GELU (erf form)
# ---------------------------------------------------------------------------
def _erf_approx(z):
    """erf via Abramowitz & Stegun 7.1.26 (|abs err| <= 1.5e-7).

    Only exp/abs/where/mul/add/div (all with Mosaic lowerings). The divide is
    kept exact (not pl.reciprocal(approx=True)) so the fused output stays
    within the 1e-4 test tolerance; the kernel is MXU-bound after retiling, so
    the extra VPU fixups are hidden filler.
    """
    a1, a2, a3, a4, a5 = (0.254829592, -0.284496736, 1.421413741,
                          -1.453152027, 1.061405429)
    p = 0.3275911
    az = jnp.abs(z)
    t = 1.0 / (1.0 + p * az)
    poly = t * (a1 + t * (a2 + t * (a3 + t * (a4 + t * a5))))
    e = 1.0 - poly * jnp.exp(-az * az)
    return jnp.where(z >= 0, e, -e)


def _gelu_exact(h):
    # nn.GELU() default in PyTorch is the exact erf form.
    return 0.5 * h * (1.0 + _erf_approx(h * (2.0 ** -0.5)))


# ---------------------------------------------------------------------------
# Kernels
# ---------------------------------------------------------------------------
def _mlp_kernel_resident(x_ref, w1_ref, b1_ref, w2_ref, b2_ref, o_ref):
    """One row tile of the fused MLP with fully VMEM-resident weights."""
    h = jnp.dot(x_ref[...], w1_ref[...], preferred_element_type=jnp.float32)
    h = _gelu_exact(h + b1_ref[...])
    # TODO(synk): channel_mask (None by default) would be a per-sample column
    # scale on h here; dropout (p=0.0) and norm_layer=None (Identity) are no-ops.
    y = jnp.dot(h.astype(w2_ref.dtype), w2_ref[...],
                preferred_element_type=jnp.float32)
    o_ref[...] = (y + b2_ref[...]).astype(o_ref.dtype)


def _mlp_kernel_tiled(x_ref, w1_ref, b1_ref, w2_ref, b2_ref, o_ref, acc_ref):
    """(row-tile, hidden-tile) step; hidden axis reduced into a resident acc."""
    j = pl.program_id(1)

    @pl.when(j == 0)
    def _init():
        acc_ref[...] = jnp.zeros_like(acc_ref)

    h = jnp.dot(x_ref[...], w1_ref[...], preferred_element_type=jnp.float32)
    h = _gelu_exact(h + b1_ref[...])
    acc_ref[...] += jnp.dot(h.astype(w2_ref.dtype), w2_ref[...],
                            preferred_element_type=jnp.float32)

    @pl.when(j == pl.num_programs(1) - 1)
    def _finalize():
        o_ref[...] = (acc_ref[...] + b2_ref[...]).astype(o_ref.dtype)


# ---------------------------------------------------------------------------
# Tiling / VMEM sizing helpers
# ---------------------------------------------------------------------------
_MXU_ROWS = 256   # MXU-aligned row granule (v6e/v7x; also a multiple of v5e's 128)
_LANE = 128


def _vmem_capacity_bytes():
    try:
        info = pltpu.get_tpu_info()
        return int(getattr(info, "vmem_capacity_bytes", 64 << 20))
    except Exception:
        return 64 << 20   # v7x per-TC floor: safe default on every generation


def _vmem_limit(need_bytes, cap_bytes):
    return int(max(32 << 20, min(need_bytes + (8 << 20), cap_bytes - (2 << 20))))


def _choose_row_tile(m, block_m, itemsize):
    """MXU-aligned row tile + padded row count (never a giant full-dim fallback)."""
    sub = 16 if itemsize < 4 else 8                 # bf16 packs 16 sublanes/vreg
    block_m = max(_MXU_ROWS, _round_up(block_m, _MXU_ROWS))
    if m > block_m:
        tm = block_m
    elif m >= 2 * _MXU_ROWS:
        # Split into >=2 row tiles so the "parallel" axis can shard across
        # both TensorCores on v7x.
        tm = _round_up((m + 1) // 2, sub)
    else:
        tm = _round_up(max(m, sub), sub)
    return tm, _round_up(m, tm)


def _pick_hidden_tile(h, block_h):
    """Largest multiple of 128 dividing h (h is already 128-aligned) <= block_h."""
    block_h = max(_LANE, _round_up(block_h, _LANE))
    best = _LANE
    t = _LANE
    while t <= block_h:
        if h % t == 0:
            best = t
        t += _LANE
    return best


# ---------------------------------------------------------------------------
# Param prep (one-time; hoisted out of the per-call path)
# ---------------------------------------------------------------------------
def prepare_mlp_params(w1, b1, w2, b2, *, width_mult=1.0, num_heads=8,
                       compute_dtype=None):
    """DynaLinear hidden-dim slicing, transpose to matmul-ready (C_in,H)/(H,C_out)
    layouts, 128-lane zero-padding of H, and cast of the MXU operands to
    compute_dtype (e.g. bf16). Biases stay f32 (they add onto f32 accumulators).

    w1: (H, C_in), b1: (H,), w2: (C_out, H), b2: (C_out,)   -- nn.Linear layout.
    """
    w1 = jnp.asarray(w1); b1 = jnp.asarray(b1)
    w2 = jnp.asarray(w2); b2 = jnp.asarray(b2)
    h_full, c_in = w1.shape
    c_out, h_full2 = w2.shape
    assert h_full == h_full2 and b1.shape == (h_full,) and b2.shape == (c_out,)

    if compute_dtype is None:
        compute_dtype = w1.dtype
    compute_dtype = jnp.dtype(compute_dtype)

    # DynaLinear: fc1 dyna_dim=[False, True], fc2 dyna_dim=[True, False]
    # -> only the hidden dimension is sliced.
    h_eff = round_to_nearest(h_full, width_mult, num_heads)
    w1 = w1[:h_eff]
    b1 = b1[:h_eff]
    w2 = w2[:, :h_eff]

    w1t = w1.T.astype(compute_dtype)                   # (C_in, H)
    w2t = w2.T.astype(compute_dtype)                   # (H, C_out)
    b1r = b1.astype(jnp.float32).reshape(1, h_eff)
    b2r = b2.astype(jnp.float32).reshape(1, c_out)

    # Lane-align H with zeros: gelu(0 + 0) = 0 and the padded W2 rows are 0,
    # so padded columns contribute exactly nothing.
    h_pad = _round_up(h_eff, _LANE)
    if h_pad > h_eff:
        w1t = jnp.pad(w1t, ((0, 0), (0, h_pad - h_eff)))
        w2t = jnp.pad(w2t, ((0, h_pad - h_eff), (0, 0)))
        b1r = jnp.pad(b1r, ((0, 0), (0, h_pad - h_eff)))
    return w1t, b1r, w2t, b2r


# ---------------------------------------------------------------------------
# Forward
# ---------------------------------------------------------------------------
def mlp_forward_prepared(x, params, *, block_m=None, block_h=1024,
                         force_hidden_tiling=False):
    """Fused Mlp.forward (channel_mask=None) on prepared params.

    x: (B, N, C_in). params: output of prepare_mlp_params.
    """
    w1t, b1r, w2t, b2r = params
    c_in, h = w1t.shape
    _, c_out = w2t.shape
    b, n, c_in2 = x.shape
    assert c_in2 == c_in

    out_dtype = x.dtype
    compute_dtype = w1t.dtype
    wsize = jnp.dtype(compute_dtype).itemsize
    osize = jnp.dtype(out_dtype).itemsize

    m = b * n
    vmem_cap = _vmem_capacity_bytes()

    # ----- weight-resident fast path: sizing check -----
    tm_res, m_pad_res = _choose_row_tile(m, block_m or 256, wsize)
    need_resident = (
        (w1t.size + w2t.size) * wsize          # weights, single-buffered
        + (b1r.size + b2r.size) * 4            # biases, single-buffered
        + 2 * tm_res * c_in * wsize            # x tile, double-buffered
        + 2 * tm_res * c_out * osize           # out tile, double-buffered
        + 4 * tm_res * h * 4                   # f32 hidden/GELU temporaries
        + (4 << 20))                           # compiler-internal headroom
    budget = max(32 << 20, min(vmem_cap, 128 << 20) - (16 << 20))
    resident = (not force_hidden_tiling) and need_resident <= budget

    x2 = x.reshape(m, c_in).astype(compute_dtype)

    if resident:
        tm, m_pad = tm_res, m_pad_res
        if m_pad > m:
            x2 = jnp.pad(x2, ((0, m_pad - m), (0, 0)))
        out = pl.pallas_call(
            _mlp_kernel_resident,
            out_shape=jax.ShapeDtypeStruct((m_pad, c_out), out_dtype),
            grid_spec=pltpu.PrefetchScalarGridSpec(
                num_scalar_prefetch=0,
                grid=(m_pad // tm,),
                in_specs=[
                    pl.BlockSpec((tm, c_in), lambda i: (i, 0)),       # x rows
                    # Constant-index weights/biases: fetched once, 1 buffer.
                    pl.BlockSpec((c_in, h), lambda i: (0, 0),
                                 pipeline_mode=pl.Buffered(1)),       # W1^T
                    pl.BlockSpec((1, h), lambda i: (0, 0),
                                 pipeline_mode=pl.Buffered(1)),       # b1
                    pl.BlockSpec((h, c_out), lambda i: (0, 0),
                                 pipeline_mode=pl.Buffered(1)),       # W2^T
                    pl.BlockSpec((1, c_out), lambda i: (0, 0),
                                 pipeline_mode=pl.Buffered(1)),       # b2
                ],
                out_specs=pl.BlockSpec((tm, c_out), lambda i: (i, 0)),
            ),
            compiler_params=pltpu.CompilerParams(
                dimension_semantics=("parallel",),
                vmem_limit_bytes=_vmem_limit(need_resident, vmem_cap),
            ),
        )(x2, w1t, b1r, w2t, b2r)
    else:
        # Hidden-tiled fallback for weights too large to keep VMEM-resident.
        tm, m_pad = _choose_row_tile(m, block_m or 512, wsize)
        if m_pad > m:
            x2 = jnp.pad(x2, ((0, m_pad - m), (0, 0)))
        th = _pick_hidden_tile(h, block_h)
        need_tiled = (
            2 * (tm * c_in * wsize + c_in * th * wsize + th * 4
                 + th * c_out * wsize + c_out * 4 + tm * c_out * osize)
            + tm * c_out * 4                   # f32 accumulator scratch
            + 4 * tm * th * 4                  # f32 hidden/GELU temporaries
            + (4 << 20))
        out = pl.pallas_call(
            _mlp_kernel_tiled,
            out_shape=jax.ShapeDtypeStruct((m_pad, c_out), out_dtype),
            grid_spec=pltpu.PrefetchScalarGridSpec(
                num_scalar_prefetch=0,
                grid=(m_pad // tm, h // th),
                in_specs=[
                    pl.BlockSpec((tm, c_in), lambda i, j: (i, 0)),    # x rows
                    pl.BlockSpec((c_in, th), lambda i, j: (0, j)),    # W1^T cols
                    pl.BlockSpec((1, th), lambda i, j: (0, j)),       # b1 slice
                    pl.BlockSpec((th, c_out), lambda i, j: (j, 0)),   # W2^T rows
                    pl.BlockSpec((1, c_out), lambda i, j: (0, 0),
                                 pipeline_mode=pl.Buffered(1)),       # b2
                ],
                out_specs=pl.BlockSpec((tm, c_out), lambda i, j: (i, 0)),
                scratch_shapes=[pltpu.VMEM((tm, c_out), jnp.float32)],
            ),
            compiler_params=pltpu.CompilerParams(
                dimension_semantics=("parallel", "arbitrary"),
                vmem_limit_bytes=_vmem_limit(need_tiled, vmem_cap),
            ),
        )(x2, w1t, b1r, w2t, b2r)

    return out[:m].reshape(b, n, c_out)


def mlp_forward(x, w1, b1, w2, b2, *, width_mult=1.0, num_heads=8,
                compute_dtype=None, block_m=None, block_h=1024,
                force_hidden_tiling=False):
    """Convenience wrapper. For repeated calls (one per DiT block / diffusion
    step) call prepare_mlp_params once and reuse via mlp_forward_prepared."""
    params = prepare_mlp_params(w1, b1, w2, b2, width_mult=width_mult,
                                num_heads=num_heads, compute_dtype=compute_dtype)
    return mlp_forward_prepared(x, params, block_m=block_m, block_h=block_h,
                                force_hidden_tiling=force_hidden_tiling)


def mlp_reference(x, w1, b1, w2, b2, *, width_mult=1.0, num_heads=8):
    """Pure-JAX reference mirroring the PyTorch Mlp.forward exactly."""
    h_eff = round_to_nearest(w1.shape[0], width_mult, num_heads)
    w1 = w1[:h_eff]
    b1 = b1[:h_eff]
    w2 = w2[:, :h_eff]
    h = x @ w1.T + b1
    h = jax.nn.gelu(h, approximate=False)          # exact (erf) GELU
    return h @ w2.T + b2


if __name__ == "__main__":
    # Small shapes consistent with the module: B=2, tokens N=8,
    # in_features=out_features=128, hidden_features=512 (4x), num_heads=8.
    B, N, C, H = 2, 8, 128, 512
    num_heads = 8

    key = jax.random.PRNGKey(0)
    kx, kw1, kb1, kw2, kb2 = jax.random.split(key, 5)

    x = jax.random.normal(kx, (B, N, C), dtype=jnp.float32)
    # PyTorch nn.Linear convention: weight is (out_features, in_features).
    w1 = jax.random.normal(kw1, (H, C), dtype=jnp.float32) * (C ** -0.5)
    b1 = jax.random.normal(kb1, (H,), dtype=jnp.float32) * 0.1
    w2 = jax.random.normal(kw2, (C, H), dtype=jnp.float32) * (H ** -0.5)
    b2 = jax.random.normal(kb2, (C,), dtype=jnp.float32) * 0.1

    ref = mlp_reference(x, w1, b1, w2, b2, width_mult=1.0, num_heads=num_heads)

    # One-time param prep (hoisted out of the per-call path).
    params_f32 = prepare_mlp_params(w1, b1, w2, b2, width_mult=1.0,
                                    num_heads=num_heads)

    # 1) Weight-resident fast path (the common case for DiT-sized MLPs).
    out = jax.block_until_ready(mlp_forward_prepared(x, params_f32))
    assert out.shape == (B, N, C)
    assert jnp.allclose(out, ref, atol=1e-4, rtol=1e-4), "resident path mismatch"

    # 2) Hidden-tiled fallback (forced; block_h=128 -> 4-step reduction
    #    exercising the pl.when init/finalize accumulator path).
    out_t = jax.block_until_ready(
        mlp_forward_prepared(x, params_f32, block_h=128,
                             force_hidden_tiling=True))
    assert jnp.allclose(out_t, ref, atol=1e-4, rtol=1e-4), "tiled path mismatch"

    # 3) bf16 MXU operands with f32 accumulation (loose tolerance vs f32 ref).
    params_bf16 = prepare_mlp_params(w1, b1, w2, b2, width_mult=1.0,
                                     num_heads=num_heads,
                                     compute_dtype=jnp.bfloat16)
    out_bf = jax.block_until_ready(mlp_forward_prepared(x, params_bf16))
    assert jnp.allclose(out_bf.astype(jnp.float32), ref,
                        atol=1e-1, rtol=1e-1), "bf16 path mismatch"

    print("KERNEL_OK")
</pallas_src>

<mosaic_0001>
module attributes {stable_mosaic.version = 11 : i64} {
  func.func @_mlp_kernel_resident(%arg0: i32, %arg1: memref<16x128xf32, #tpu.memory_space<vmem>>, %arg2: memref<128x512xf32, #tpu.memory_space<vmem>>, %arg3: memref<1x512xf32, #tpu.memory_space<vmem>>, %arg4: memref<512x128xf32, #tpu.memory_space<vmem>>, %arg5: memref<1x128xf32, #tpu.memory_space<vmem>>, %arg6: memref<16x128xf32, #tpu.memory_space<vmem>>) attributes {dimension_semantics = [#tpu.dimension_semantics<parallel>], iteration_bounds = array<i64: 1>, scalar_prefetch = 0 : i64, scratch_operands = 0 : i64, tpu.core_type = #tpu.core_type<tc>, window_params = [{transform_indices = @transform_0, window_bounds = array<i64: 16, 128>}, {pipeline_mode = #tpu.pipeline_mode<synchronous>, transform_indices = @transform_1, window_bounds = array<i64: 128, 512>}, {pipeline_mode = #tpu.pipeline_mode<synchronous>, transform_indices = @transform_2, window_bounds = array<i64: 1, 512>}, {pipeline_mode = #tpu.pipeline_mode<synchronous>, transform_indices = @transform_3, window_bounds = array<i64: 512, 128>}, {pipeline_mode = #tpu.pipeline_mode<synchronous>, transform_indices = @transform_4, window_bounds = array<i64: 1, 128>}, {transform_indices = @transform_5, window_bounds = array<i64: 16, 128>}]} {
    %c0 = arith.constant 0 : index
    %c0_0 = arith.constant 0 : index
    %0 = vector.load %arg1[%c0, %c0_0] : memref<16x128xf32, #tpu.memory_space<vmem>>, vector<16x128xf32>
    %c0_1 = arith.constant 0 : index
    %c0_2 = arith.constant 0 : index
    %1 = vector.load %arg2[%c0_1, %c0_2] : memref<128x512xf32, #tpu.memory_space<vmem>>, vector<128x512xf32>
    %cst = arith.constant dense<0.000000e+00> : vector<16x512xf32>
    %2 = tpu.matmul %0, %1, %cst {dimension_numbers = #tpu.dot_dimension_numbers<[1], [0], [0], [1], [0, 0, 1, 1], [], []>} : vector<16x128xf32>, vector<128x512xf32>, vector<16x512xf32> -> vector<16x512xf32>
    %c0_3 = arith.constant 0 : index
    %c0_4 = arith.constant 0 : index
    %3 = vector.load %arg3[%c0_3, %c0_4] : memref<1x512xf32, #tpu.memory_space<vmem>>, vector<1x512xf32>
    %4 = vector.broadcast %3 : vector<1x512xf32> to vector<16x512xf32>
    %5 = arith.addf %2, %4 : vector<16x512xf32>
    %cst_5 = arith.constant 5.000000e-01 : f32
    %6 = vector.broadcast %cst_5 : f32 to vector<16x512xf32>
    %7 = arith.mulf %6, %5 : vector<16x512xf32>
    %cst_6 = arith.constant 0.707106769 : f32
    %8 = vector.broadcast %cst_6 : f32 to vector<16x512xf32>
    %9 = arith.mulf %5, %8 : vector<16x512xf32>
    %10 = math.absf %9 : vector<16x512xf32>
    %cst_7 = arith.constant 0.327591091 : f32
    %11 = vector.broadcast %cst_7 : f32 to vector<16x512xf32>
    %12 = arith.mulf %11, %10 : vector<16x512xf32>
    %cst_8 = arith.constant 1.000000e+00 : f32
    %13 = vector.broadcast %cst_8 : f32 to vector<16x512xf32>
    %14 = arith.addf %13, %12 : vector<16x512xf32>
    %cst_9 = arith.constant 1.000000e+00 : f32
    %15 = vector.broadcast %cst_9 : f32 to vector<16x512xf32>
    %16 = arith.divf %15, %14 : vector<16x512xf32>
    %cst_10 = arith.constant 1.06140542 : f32
    %17 = vector.broadcast %cst_10 : f32 to vector<16x512xf32>
    %18 = arith.mulf %16, %17 : vector<16x512xf32>
    %cst_11 = arith.constant -1.45315206 : f32
    %19 = vector.broadcast %cst_11 : f32 to vector<16x512xf32>
    %20 = arith.addf %19, %18 : vector<16x512xf32>
    %21 = arith.mulf %16, %20 : vector<16x512xf32>
    %cst_12 = arith.constant 1.42141378 : f32
    %22 = vector.broadcast %cst_12 : f32 to vector<16x512xf32>
    %23 = arith.addf %22, %21 : vector<16x512xf32>
    %24 = arith.mulf %16, %23 : vector<16x512xf32>
    %cst_13 = arith.constant -0.284496725 : f32
    %25 = vector.broadcast %cst_13 : f32 to vector<16x512xf32>
    %26 = arith.addf %25, %24 : vector<16x512xf32>
    %27 = arith.mulf %16, %26 : vector<16x512xf32>
    %cst_14 = arith.constant 0.254829586 : f32
    %28 = vector.broadcast %cst_14 : f32 to vector<16x512xf32>
    %29 = arith.addf %28, %27 : vector<16x512xf32>
    %30 = arith.mulf %16, %29 : vector<16x512xf32>
    %cst_15 = arith.constant 0.000000e+00 : f32
    %31 = vector.broadcast %cst_15 : f32 to vector<16x512xf32>
    %32 = arith.subf %31, %10 : vector<16x512xf32>
    %33 = arith.mulf %32, %10 : vector<16x512xf32>
    %34 = math.exp %33 : vector<16x512xf32>
    %35 = arith.mulf %30, %34 : vector<16x512xf32>
    %cst_16 = arith.constant 1.000000e+00 : f32
    %36 = vector.broadcast %cst_16 : f32 to vector<16x512xf32>
    %37 = arith.subf %36, %35 : vector<16x512xf32>
    %cst_17 = arith.constant 0.000000e+00 : f32
    %38 = vector.broadcast %cst_17 : f32 to vector<16x512xf32>
    %39 = arith.cmpf oge, %9, %38 : vector<16x512xf32>
    %cst_18 = arith.constant 0.000000e+00 : f32
    %40 = vector.broadcast %cst_18 : f32 to vector<16x512xf32>
    %41 = arith.subf %40, %37 : vector<16x512xf32>
    %42 = arith.select %39, %37, %41 : vector<16x512xi1>, vector<16x512xf32>
    %cst_19 = arith.constant 1.000000e+00 : f32
    %43 = vector.broadcast %cst_19 : f32 to vector<16x512xf32>
    %44 = arith.addf %43, %42 : vector<16x512xf32>
    %45 = arith.mulf %7, %44 : vector<16x512xf32>
    %c0_20 = arith.constant 0 : index
    %c0_21 = arith.constant 0 : index
    %46 = vector.load %arg4[%c0_20, %c0_21] : memref<512x128xf32, #tpu.memory_space<vmem>>, vector<512x128xf32>
    %cst_22 = arith.constant dense<0.000000e+00> : vector<16x128xf32>
    %47 = tpu.matmul %45, %46, %cst_22 {dimension_numbers = #tpu.dot_dimension_numbers<[1], [0], [0], [1], [0, 0, 1, 1], [], []>} : vector<16x512xf32>, vector<512x128xf32>, vector<16x128xf32> -> vector<16x128xf32>
    %c0_23 = arith.constant 0 : index
    %c0_24 = arith.constant 0 : index
    %48 = vector.load %arg5[%c0_23, %c0_24] : memref<1x128xf32, #tpu.memory_space<vmem>>, vector<1x128xf32>
    %49 = vector.broadcast %48 : vector<1x128xf32> to vector<16x128xf32>
    %50 = arith.addf %47, %49 : vector<16x128xf32>
    %c0_25 = arith.constant 0 : index
    %c0_26 = arith.constant 0 : index
    %51 = vector.load %arg6[%c0_25, %c0_26] : memref<16x128xf32, #tpu.memory_space<vmem>>, vector<16x128xf32>
    tpu.vector_store %arg6[%c0_25, %c0_26], %50 {strides = array<i32>} : memref<16x128xf32, #tpu.memory_space<vmem>>, vector<16x128xf32>,
    return
  }
  func.func @transform_0(%arg0: i32) -> (i32, i32) {
    %c0_i32 = arith.constant 0 : i32
    %c0_i32_0 = arith.constant 0 : i32
    return %arg0, %c0_i32 : i32, i32
  }
  func.func @transform_1(%arg0: i32) -> (i32, i32) {
    %c0_i32 = arith.constant 0 : i32
    %c0_i32_0 = arith.constant 0 : i32
    %c0_i32_1 = arith.constant 0 : i32
    return %c0_i32, %c0_i32_0 : i32, i32
  }
  func.func @transform_2(%arg0: i32) -> (i32, i32) {
    %c0_i32 = arith.constant 0 : i32
    %c0_i32_0 = arith.constant 0 : i32
    %c0_i32_1 = arith.constant 0 : i32
    return %c0_i32, %c0_i32_0 : i32, i32
  }
  func.func @transform_3(%arg0: i32) -> (i32, i32) {
    %c0_i32 = arith.constant 0 : i32
    %c0_i32_0 = arith.constant 0 : i32
    %c0_i32_1 = arith.constant 0 : i32
    return %c0_i32, %c0_i32_0 : i32, i32
  }
  func.func @transform_4(%arg0: i32) -> (i32, i32) {
    %c0_i32 = arith.constant 0 : i32
    %c0_i32_0 = arith.constant 0 : i32
    %c0_i32_1 = arith.constant 0 : i32
    return %c0_i32, %c0_i32_0 : i32, i32
  }
  func.func @transform_5(%arg0: i32) -> (i32, i32) {
    %c0_i32 = arith.constant 0 : i32
    %c0_i32_0 = arith.constant 0 : i32
    return %arg0, %c0_i32 : i32, i32
  }
}

</mosaic_0001>

<llo_original>
// kernel: tpu_custom_call.1
$region0: #{tpu_custom_call.1}
  #allocation0 [shape = 'u32[]', space=smem, size = 0x4, offset = 0x4, fixed_abs, tag = 'smem constant byte address 0x4 - core index']
  #allocation1 [shape = 'u32[144,128]{1,0:T(1,128)}', space=vmem, size = 0x12000, scoped, tag = 'internal scratch']
  %s0 = inlined_call_operand.hbm [shape: f32[16,128], index: 0, kind: input, shape index: {}]
  %s1 = inlined_call_operand.hbm [shape: f32[128,512], index: 1, kind: input, shape index: {}]
  %s2 = inlined_call_operand.vmem [shape: f32[1,512], index: 2, kind: input, shape index: {}]
  %s3 = inlined_call_operand.hbm [shape: f32[512,128], index: 3, kind: input, shape index: {}]
  %s4 = inlined_call_operand.vmem [shape: f32[1,128], index: 4, kind: input, shape index: {}]
  %s5 = inlined_call_operand.hbm [shape: f32[16,128], index: 5, kind: output, shape index: {}]
  %s6 = sld [smem:[#allocation0]]
  $region42: #{tpu_custom_call.1} parent=0
    _
  %s8 = ssub.s32 1, %s6
  %s9 = scalar_select 0, %s8, %s6
  $region1: #{tpu_custom_call.1} parent=0
    #allocation2 [shape = 'u8[8192]{0}', space=vmem, size = 0x2000, scoped, tag = 'input window, operand 0, single buffered']
    #allocation3 [shape = 's32[1]{0}', space=sflag, size = 0x4, scoped, tag = 'scoped memory for tpu_custom_call.1']
    #allocation4 [shape = 's32[1]{0}', space=sflag, size = 0x4, scoped, tag = 'scoped memory for tpu_custom_call.1']
    #allocation5 [shape = 'u8[262144]{0}', space=vmem, size = 0x40000, scoped, tag = 'input window, operand 1, single buffered']
    #allocation6 [shape = 's32[1]{0}', space=sflag, size = 0x4, scoped, tag = 'scoped memory for tpu_custom_call.1']
    #allocation7 [shape = 'u8[262144]{0}', space=vmem, size = 0x40000, scoped, tag = 'input window, operand 3, single buffered']
    #allocation8 [shape = 'u8[8192]{0}', space=vmem, size = 0x2000, scoped, tag = 'output window, operand 0, single buffered']
    %10 = vsyncpa [#allocation3], 0
    %11 = vsyncpa [#allocation6], 0
    %12 = vsyncpa [#allocation4], 0
    // Predicated region
    $region2: #{tpu_custom_call.1} parent=1 // pred_check
      _
    $region3: #{tpu_custom_call.1} parent=1 // pred_check_branch
      %14 = sbr.rel (0) target = $region5
    $region4: #{tpu_custom_call.1} parent=1 // pred_region
      %s16 = ssub.s32 256, 256
      %17 = vsyncadd [#allocation3], %s16
      %s18 = sshll.u32 [#allocation2], 4
      %s19 = int_to_ptr.vmem [resolvable:$true] %s18
      %24 = dma.hbm_to_vmem [thread:$0]  %s0, 256, %s19, [#allocation3], 128, 128, 8
    $region5: #{tpu_custom_call.1} parent=1 // pred_fallthru
      _
    // Predicated region
    $region6: #{tpu_custom_call.1} parent=1 // pred_check
      _
    $region7: #{tpu_custom_call.1} parent=1 // pred_check_branch
      %26 = sbr.rel (0) target = $region9
    $region8: #{tpu_custom_call.1} parent=1 // pred_region
      %s28 = ssub.s32 8192, 8192
      %29 = vsyncadd [#allocation6], %s28
      %s30 = sshll.u32 [#allocation5], 4
      %s31 = int_to_ptr.vmem [resolvable:$true] %s30
      %36 = dma.hbm_to_vmem [thread:$0]  %s1, 8192, %s31, [#allocation6], 512, 512, 32
    $region9: #{tpu_custom_call.1} parent=1 // pred_fallthru
      _
    // Predicated region
    $region10: #{tpu_custom_call.1} parent=1 // pred_check
      _
    $region11: #{tpu_custom_call.1} parent=1 // pred_check_branch
      %38 = sbr.rel (0) target = $region13
    $region12: #{tpu_custom_call.1} parent=1 // pred_region
      _
    $region13: #{tpu_custom_call.1} parent=1 // pred_fallthru
      _
    // Predicated region
    $region14: #{tpu_custom_call.1} parent=1 // pred_check
      _
    $region15: #{tpu_custom_call.1} parent=1 // pred_check_branch
      %40 = sbr.rel (0) target = $region17
    $region16: #{tpu_custom_call.1} parent=1 // pred_region
      %s42 = ssub.s32 8192, 8192
      %43 = vsyncadd [#allocation6], %s42
      %s44 = sshll.u32 [#allocation7], 4
      %s45 = int_to_ptr.vmem [resolvable:$true] %s44
      %50 = dma.hbm_to_vmem [thread:$0]  %s3, 8192, %s45, [#allocation6], 128, 128, 8
    $region17: #{tpu_custom_call.1} parent=1 // pred_fallthru
      _
    // Predicated region
    $region18: #{tpu_custom_call.1} parent=1 // pred_check
      _
    $region19: #{tpu_custom_call.1} parent=1 // pred_check_branch
      %52 = sbr.rel (0) target = $region21
    $region20: #{tpu_custom_call.1} parent=1 // pred_region
      _
    $region21: #{tpu_custom_call.1} parent=1 // pred_fallthru
      _
    // Predicated region
    $region22: #{tpu_custom_call.1} parent=1 // pred_check
      _
    $region23: #{tpu_custom_call.1} parent=1 // pred_check_branch
      %54 = sbr.rel (0) target = $region25
    $region24: #{tpu_custom_call.1} parent=1 // pred_region
      %55 = dma.done [#allocation3], 256
    $region25: #{tpu_custom_call.1} parent=1 // pred_fallthru
      _
    // Predicated region
    $region26: #{tpu_custom_call.1} parent=1 // pred_check
      _
    $region27: #{tpu_custom_call.1} parent=1 // pred_check_branch
      %57 = sbr.rel (0) target = $region29
    $region28: #{tpu_custom_call.1} parent=1 // pred_region
      %58 = dma.done [#allocation6], 8192
    $region29: #{tpu_custom_call.1} parent=1 // pred_fallthru
      _
    // Predicated region
    $region30: #{tpu_custom_call.1} parent=1 // pred_check
      _
    $region31: #{tpu_custom_call.1} parent=1 // pred_check_branch
      %60 = sbr.rel (0) target = $region33
    $region32: #{tpu_custom_call.1} parent=1 // pred_region
      %61 = dma.done [#allocation6], 8192
    $region33: #{tpu_custom_call.1} parent=1 // pred_fallthru
      _
    %v62 = vld [vmem:[#allocation2] sm:$0xff]
    %v63 = vld [vmem:[#allocation2 + $0x8] sm:$0xff]
    %v64 = vld [vmem:[#allocation5] sm:$0xff]
    %v65 = vld [vmem:[#allocation5 + $0x8] sm:$0xff]
    %v66 = vld [vmem:[#allocation5 + $0x10] sm:$0xff]
    %v67 = vld [vmem:[#allocation5 + $0x18] sm:$0xff]
    %v68 = vld [vmem:[#allocation5 + $0x20] sm:$0xff]
    %v69 = vld [vmem:[#allocation5 + $0x28] sm:$0xff]
    %v70 = vld [vmem:[#allocation5 + $0x30] sm:$0xff]
    %v71 = vld [vmem:[#allocation5 + $0x38] sm:$0xff]
    %v72 = vld [vmem:[#allocation5 + $0x40] sm:$0xff]
    %v73 = vld [vmem:[#allocation5 + $0x48] sm:$0xff]
    %v74 = vld [vmem:[#allocation5 + $0x50] sm:$0xff]
    %v75 = vld [vmem:[#allocation5 + $0x58] sm:$0xff]
    %v76 = vld [vmem:[#allocation5 + $0x60] sm:$0xff]
    %v77 = vld [vmem:[#allocation5 + $0x68] sm:$0xff]
    %v78 = vld [vmem:[#allocation5 + $0x70] sm:$0xff]
    %v79 = vld [vmem:[#allocation5 + $0x78] sm:$0xff]
    %v80 = vld [vmem:[#allocation5 + $0x80] sm:$0xff]
    %v81 = vld [vmem:[#allocation5 + $0x88] sm:$0xff]
    %v82 = vld [vmem:[#allocation5 + $0x90] sm:$0xff]
    %v83 = vld [vmem:[#allocation5 + $0x98] sm:$0xff]
    %v84 = vld [vmem:[#allocation5 + $0xa0] sm:$0xff]
    %v85 = vld [vmem:[#allocation5 + $0xa8] sm:$0xff]
    %v86 = vld [vmem:[#allocation5 + $0xb0] sm:$0xff]
    %v87 = vld [vmem:[#allocation5 + $0xb8] sm:$0xff]
    %v88 = vld [vmem:[#allocation5 + $0xc0] sm:$0xff]
    %v89 = vld [vmem:[#allocation5 + $0xc8] sm:$0xff]
    %v90 = vld [vmem:[#allocation5 + $0xd0] sm:$0xff]
    %v91 = vld [vmem:[#allocation5 + $0xd8] sm:$0xff]
    %v92 = vld [vmem:[#allocation5 + $0xe0] sm:$0xff]
    %v93 = vld [vmem:[#allocation5 + $0xe8] sm:$0xff]
    %v94 = vld [vmem:[#allocation5 + $0xf0] sm:$0xff]
    %v95 = vld [vmem:[#allocation5 + $0xf8] sm:$0xff]
    %v96 = vld [vmem:[#allocation5 + $0x100] sm:$0xff]
    %v97 = vld [vmem:[#allocation5 + $0x108] sm:$0xff]
    %v98 = vld [vmem:[#allocation5 + $0x110] sm:$0xff]
    %v99 = vld [vmem:[#allocation5 + $0x118] sm:$0xff]
    %v100 = vld [vmem:[#allocation5 + $0x120] sm:$0xff]
    %v101 = vld [vmem:[#allocation5 + $0x128] sm:$0xff]
    %v102 = vld [vmem:[#allocation5 + $0x130] sm:$0xff]
    %v103 = vld [vmem:[#allocation5 + $0x138] sm:$0xff]
    %v104 = vld [vmem:[#allocation5 + $0x140] sm:$0xff]
    %v105 = vld [vmem:[#allocation5 + $0x148] sm:$0xff]
    %v106 = vld [vmem:[#allocation5 + $0x150] sm:$0xff]
    %v107 = vld [vmem:[#allocation5 + $0x158] sm:$0xff]
    %v108 = vld [vmem:[#allocation5 + $0x160] sm:$0xff]
    %v109 = vld [vmem:[#allocation5 + $0x168] sm:$0xff]
    %v110 = vld [vmem:[#allocation5 + $0x170] sm:$0xff]
    %v111 = vld [vmem:[#allocation5 + $0x178] sm:$0xff]
    %v112 = vld [vmem:[#allocation5 + $0x180] sm:$0xff]
    %v113 = vld [vmem:[#allocation5 + $0x188] sm:$0xff]
    %v114 = vld [vmem:[#allocation5 + $0x190] sm:$0xff]
    %v115 = vld [vmem:[#allocation5 + $0x198] sm:$0xff]
    %v116 = vld [vmem:[#allocation5 + $0x1a0] sm:$0xff]
    %v117 = vld [vmem:[#allocation5 + $0x1a8] sm:$0xff]
    %v118 = vld [vmem:[#allocation5 + $0x1b0] sm:$0xff]
    %v119 = vld [vmem:[#allocation5 + $0x1b8] sm:$0xff]
    %v120 = vld [vmem:[#allocation5 + $0x1c0] sm:$0xff]
    %v121 = vld [vmem:[#allocation5 + $0x1c8] sm:$0xff]
    %v122 = vld [vmem:[#allocation5 + $0x1d0] sm:$0xff]
    %v123 = vld [vmem:[#allocation5 + $0x1d8] sm:$0xff]
    %v124 = vld [vmem:[#allocation5 + $0x1e0] sm:$0xff]
    %v125 = vld [vmem:[#allocation5 + $0x1e8] sm:$0xff]
    %v126 = vld [vmem:[#allocation5 + $0x1f0] sm:$0xff]
    %v127 = vld [vmem:[#allocation5 + $0x1f8] sm:$0xff]
    %v128 = vld [vmem:[%s2] sm:$0xf]
    %v130 = vlaneseq
    %v131 = vshrl.u32 %v130, 7
    %v132 = vsub.s32 0, %v131
    %v133 = vrot.slane %v128, %v132
    %v134 = vlaneseq
    %v135 = vshrl.u32 %v134, 7
    %v136 = vsub.s32 1, %v135
    %v137 = vrot.slane %v128, %v136
    %v138 = vlaneseq
    %v139 = vshrl.u32 %v138, 7
    %v140 = vsub.s32 2, %v139
    %v141 = vrot.slane %v128, %v140
    %v142 = vlaneseq
    %v143 = vshrl.u32 %v142, 7
    %v144 = vsub.s32 3, %v143
    %v145 = vrot.slane %v128, %v144
    %150 = vmatprep.subr.mxu0 %v65
    %151 = vmatpush1.msra.mxu0 %v64
    %152 = vmatprep.subr.mxu0 %v69
    %153 = vmatpush1.msra.mxu0 %v68
    %154 = vmatprep.subr.mxu0 %v73
    %155 = vmatpush1.msra.mxu0 %v72
    %156 = vmatprep.subr.mxu0 %v77
    %157 = vmatpush1.msra.mxu0 %v76
    %158 = vmatprep.subr.mxu0 %v81
    %159 = vmatpush1.msra.mxu0 %v80
    %160 = vmatprep.subr.mxu0 %v85
    %161 = vmatpush1.msra.mxu0 %v84
    %162 = vmatprep.subr.mxu0 %v89
    %163 = vmatpush1.msra.mxu0 %v88
    %164 = vmatprep.subr.mxu0 %v93
    %165 = vmatpush1.msra.mxu0 %v92
    %166 = vmatprep.subr.mxu0 %v97
    %167 = vmatpush1.msra.mxu0 %v96
    %168 = vmatprep.subr.mxu0 %v101
    %169 = vmatpush1.msra.mxu0 %v100
    %170 = vmatprep.subr.mxu0 %v105
    %171 = vmatpush1.msra.mxu0 %v104
    %172 = vmatprep.subr.mxu0 %v109
    %173 = vmatpush1.msra.mxu0 %v108
    %174 = vmatprep.subr.mxu0 %v113
    %175 = vmatpush1.msra.mxu0 %v112
    %176 = vmatprep.subr.mxu0 %v117
    %177 = vmatpush1.msra.mxu0 %v116
    %178 = vmatprep.subr.mxu0 %v121
    %179 = vmatpush1.msra.mxu0 %v120
    %180 = vmatprep.subr.mxu0 %v125
    %181 = vmatpush1.msra.mxu0 %v124
    %182 = vmatprep.subr.mxu0 0.0
    %183 = vmatpush1.msra.mxu0 0.0
    %184 = vmatprep.subr.mxu0 0.0
    %185 = vmatpush1.msra.mxu0 0.0
    %186 = vmatprep.subr.mxu0 0.0
    %187 = vmatpush1.msra.mxu0 0.0
    %188 = vmatprep.subr.mxu0 0.0
    %189 = vmatpush1.msra.mxu0 0.0
    %190 = vmatprep.subr.mxu0 0.0
    %191 = vmatpush1.msra.mxu0 0.0
    %192 = vmatprep.subr.mxu0 0.0
    %193 = vmatpush1.msra.mxu0 0.0
    %194 = vmatprep.subr.mxu0 0.0
    %195 = vmatpush1.msra.mxu0 0.0
    %196 = vmatprep.subr.mxu0 0.0
    %197 = vmatpush1.msra.mxu0 0.0
    %198 = vmatprep.subr.mxu0 0.0
    %199 = vmatpush1.msra.mxu0 0.0
    %200 = vmatprep.subr.mxu0 0.0
    %201 = vmatpush1.msra.mxu0 0.0
    %202 = vmatprep.subr.mxu0 0.0
    %203 = vmatpush1.msra.mxu0 0.0
    %204 = vmatprep.subr.mxu0 0.0
    %205 = vmatpush1.msra.mxu0 0.0
    %206 = vmatprep.subr.mxu0 0.0
    %207 = vmatpush1.msra.mxu0 0.0
    %208 = vmatprep.subr.mxu0 0.0
    %209 = vmatpush1.msra.mxu0 0.0
    %210 = vmatprep.subr.mxu0 0.0
    %211 = vmatpush1.msra.mxu0 0.0
    %212 = vmatprep.subr.mxu0 0.0
    %213 = vmatpush1.msra.mxu0 0.0
    %214 = vmatprep.mubr.f32.mxu0 0.0
    %215 = vmatmul.mubr.f32.gmra.mrb[0].mxu0 %v62
    %v216 = vpop.f32.mrb[0].mxu0
    %v217 = vadd.f32 %v133, %v216
    %v218 = vpop.f32.mrb[0].mxu0
    %v219 = vadd.f32 %v137, %v218
    %220 = vmatprep.mubr.f32.mxu0 0.0
    %221 = vmatmul.mubr.f32.gmra.mrb[0].mxu0 %v63
    %v222 = vpop.f32.mrb[0].mxu0
    %v223 = vadd.f32 %v133, %v222
    %v224 = vpop.f32.mrb[0].mxu0
    %v225 = vadd.f32 %v137, %v224
    %226 = vdwg.mxu0
    %227 = vmatprep.subr.mxu0 %v67
    %228 = vmatpush1.msra.mxu0 %v66
    %229 = vmatprep.subr.mxu0 %v71
    %230 = vmatpush1.msra.mxu0 %v70
    %231 = vmatprep.subr.mxu0 %v75
    %232 = vmatpush1.msra.mxu0 %v74
    %233 = vmatprep.subr.mxu0 %v79
    %234 = vmatpush1.msra.mxu0 %v78
    %235 = vmatprep.subr.mxu0 %v83
    %236 = vmatpush1.msra.mxu0 %v82
    %237 = vmatprep.subr.mxu0 %v87
    %238 = vmatpush1.msra.mxu0 %v86
    %239 = vmatprep.subr.mxu0 %v91
    %240 = vmatpush1.msra.mxu0 %v90
    %241 = vmatprep.subr.mxu0 %v95
    %242 = vmatpush1.msra.mxu0 %v94
    %243 = vmatprep.subr.mxu0 %v99
    %244 = vmatpush1.msra.mxu0 %v98
    %245 = vmatprep.subr.mxu0 %v103
    %246 = vmatpush1.msra.mxu0 %v102
    %247 = vmatprep.subr.mxu0 %v107
    %248 = vmatpush1.msra.mxu0 %v106
    %249 = vmatprep.subr.mxu0 %v111
    %250 = vmatpush1.msra.mxu0 %v110
    %251 = vmatprep.subr.mxu0 %v115
    %252 = vmatpush1.msra.mxu0 %v114
    %253 = vmatprep.subr.mxu0 %v119
    %254 = vmatpush1.msra.mxu0 %v118
    %255 = vmatprep.subr.mxu0 %v123
    %256 = vmatpush1.msra.mxu0 %v122
    %257 = vmatprep.subr.mxu0 %v127
    %258 = vmatpush1.msra.mxu0 %v126
    %259 = vmatprep.subr.mxu0 0.0
    %260 = vmatpush1.msra.mxu0 0.0
    %261 = vmatprep.subr.mxu0 0.0
    %262 = vmatpush1.msra.mxu0 0.0
    %263 = vmatprep.subr.mxu0 0.0
    %264 = vmatpush1.msra.mxu0 0.0
    %265 = vmatprep.subr.mxu0 0.0
    %266 = vmatpush1.msra.mxu0 0.0
    %267 = vmatprep.subr.mxu0 0.0
    %268 = vmatpush1.msra.mxu0 0.0
    %269 = vmatprep.subr.mxu0 0.0
    %270 = vmatpush1.msra.mxu0 0.0
    %271 = vmatprep.subr.mxu0 0.0
    %272 = vmatpush1.msra.mxu0 0.0
    %273 = vmatprep.subr.mxu0 0.0
    %274 = vmatpush1.msra.mxu0 0.0
    %275 = vmatprep.subr.mxu0 0.0
    %276 = vmatpush1.msra.mxu0 0.0
    %277 = vmatprep.subr.mxu0 0.0
    %278 = vmatpush1.msra.mxu0 0.0
    %279 = vmatprep.subr.mxu0 0.0
    %280 = vmatpush1.msra.mxu0 0.0
    %281 = vmatprep.subr.mxu0 0.0
    %282 = vmatpush1.msra.mxu0 0.0
    %283 = vmatprep.subr.mxu0 0.0
    %284 = vmatpush1.msra.mxu0 0.0
    %285 = vmatprep.subr.mxu0 0.0
    %286 = vmatpush1.msra.mxu0 0.0
    %287 = vmatprep.subr.mxu0 0.0
    %288 = vmatpush1.msra.mxu0 0.0
    %289 = vmatprep.subr.mxu0 0.0
    %290 = vmatpush1.msra.mxu0 0.0
    %291 = vmatprep.mubr.f32.mxu0 0.0
    %292 = vmatmul.mubr.f32.gmra.mrb[0].mxu0 %v62
    %v293 = vpop.f32.mrb[0].mxu0
    %v294 = vadd.f32 %v141, %v293
    %v295 = vpop.f32.mrb[0].mxu0
    %v296 = vadd.f32 %v145, %v295
    %297 = vmatprep.mubr.f32.mxu0 0.0
    %298 = vmatmul.mubr.f32.gmra.mrb[0].mxu0 %v63
    %v299 = vpop.f32.mrb[0].mxu0
    %v300 = vadd.f32 %v141, %v299
    %v301 = vpop.f32.mrb[0].mxu0
    %v302 = vadd.f32 %v145, %v301
    %303 = vdwg.mxu0
    %v304 = vmul.f32 %v217, 0.5
    %v305 = vmul.f32 %v219, 0.5
    %v306 = vmul.f32 %v294, 0.5
    %v307 = vmul.f32 %v296, 0.5
    %v308 = vmul.f32 %v223, 0.5
    %v309 = vmul.f32 %v225, 0.5
    %v310 = vmul.f32 %v300, 0.5
    %v311 = vmul.f32 %v302, 0.5
    %v312 = vmul.f32 %v217, 0.70710677
    %v313 = vmul.f32 %v219, 0.70710677
    %v314 = vmul.f32 %v294, 0.70710677
    %v315 = vmul.f32 %v296, 0.70710677
    %v316 = vmul.f32 %v223, 0.70710677
    %v317 = vmul.f32 %v225, 0.70710677
    %v318 = vmul.f32 %v300, 0.70710677
    %v319 = vmul.f32 %v302, 0.70710677
    %v320 = vand.u32 2147483647, %v312
    %v321 = vand.u32 2147483647, %v313
    %v322 = vand.u32 2147483647, %v314
    %v323 = vand.u32 2147483647, %v315
    %v324 = vand.u32 2147483647, %v316
    %v325 = vand.u32 2147483647, %v317
    %v326 = vand.u32 2147483647, %v318
    %v327 = vand.u32 2147483647, %v319
    %v328 = vmul.f32 %v320, 0.3275911
    %v329 = vmul.f32 %v321, 0.3275911
    %v330 = vmul.f32 %v322, 0.3275911
    %v331 = vmul.f32 %v323, 0.3275911
    %v332 = vmul.f32 %v324, 0.3275911
    %v333 = vmul.f32 %v325, 0.3275911
    %v334 = vmul.f32 %v326, 0.3275911
    %v335 = vmul.f32 %v327, 0.3275911
    %v336 = vadd.f32 %v328, 1.0
    %v337 = vadd.f32 %v329, 1.0
    %v338 = vadd.f32 %v330, 1.0
    %v339 = vadd.f32 %v331, 1.0
    %v340 = vadd.f32 %v332, 1.0
    %v341 = vadd.f32 %v333, 1.0
    %v342 = vadd.f32 %v334, 1.0
    %v343 = vadd.f32 %v335, 1.0
    %v344 = vrcp.pop %v336
    %v345 = vmul.f32 1.0, %v344
    %v346 = vrcp.pop %v337
    %v347 = vmul.f32 1.0, %v346
    %v348 = vrcp.pop %v338
    %v349 = vmul.f32 1.0, %v348
    %v350 = vrcp.pop %v339
    %v351 = vmul.f32 1.0, %v350
    %v352 = vrcp.pop %v340
    %v353 = vmul.f32 1.0, %v352
    %v354 = vrcp.pop %v341
    %v355 = vmul.f32 1.0, %v354
    %v356 = vrcp.pop %v342
    %v357 = vmul.f32 1.0, %v356
    %v358 = vrcp.pop %v343
    %v359 = vmul.f32 1.0, %v358
    %v360 = vmul.f32 %v345, 1.0614054
    %v361 = vmul.f32 %v347, 1.0614054
    %v362 = vmul.f32 %v349, 1.0614054
    %v363 = vmul.f32 %v351, 1.0614054
    %v364 = vmul.f32 %v353, 1.0614054
    %v365 = vmul.f32 %v355, 1.0614054
    %v366 = vmul.f32 %v357, 1.0614054
    %v367 = vmul.f32 %v359, 1.0614054
    %v368 = vadd.f32 %v360, -1.4531521
    %v369 = vadd.f32 %v361, -1.4531521
    %v370 = vadd.f32 %v362, -1.4531521
    %v371 = vadd.f32 %v363, -1.4531521
    %v372 = vadd.f32 %v364, -1.4531521
    %v373 = vadd.f32 %v365, -1.4531521
    %v374 = vadd.f32 %v366, -1.4531521
    %v375 = vadd.f32 %v367, -1.4531521
    %v376 = vmul.f32 %v345, %v368
    %v377 = vmul.f32 %v347, %v369
    %v378 = vmul.f32 %v349, %v370
    %v379 = vmul.f32 %v351, %v371
    %v380 = vmul.f32 %v353, %v372
    %v381 = vmul.f32 %v355, %v373
    %v382 = vmul.f32 %v357, %v374
    %v383 = vmul.f32 %v359, %v375
    %v384 = vadd.f32 %v376, 1.4214138
    %v385 = vadd.f32 %v377, 1.4214138
    %v386 = vadd.f32 %v378, 1.4214138
    %v387 = vadd.f32 %v379, 1.4214138
    %v388 = vadd.f32 %v380, 1.4214138
    %v389 = vadd.f32 %v381, 1.4214138
    %v390 = vadd.f32 %v382, 1.4214138
    %v391 = vadd.f32 %v383, 1.4214138
    %v392 = vmul.f32 %v345, %v384
    %v393 = vmul.f32 %v347, %v385
    %v394 = vmul.f32 %v349, %v386
    %v395 = vmul.f32 %v351, %v387
    %v396 = vmul.f32 %v353, %v388
    %v397 = vmul.f32 %v355, %v389
    %v398 = vmul.f32 %v357, %v390
    %v399 = vmul.f32 %v359, %v391
    %v400 = vadd.f32 %v392, -0.28449672
    %v401 = vadd.f32 %v393, -0.28449672
    %v402 = vadd.f32 %v394, -0.28449672
    %v403 = vadd.f32 %v395, -0.28449672
    %v404 = vadd.f32 %v396, -0.28449672
    %v405 = vadd.f32 %v397, -0.28449672
    %v406 = vadd.f32 %v398, -0.28449672
    %v407 = vadd.f32 %v399, -0.28449672
    %v408 = vmul.f32 %v345, %v400
    %v409 = vmul.f32 %v347, %v401
    %v410 = vmul.f32 %v349, %v402
    %v411 = vmul.f32 %v351, %v403
    %v412 = vmul.f32 %v353, %v404
    %v413 = vmul.f32 %v355, %v405
    %v414 = vmul.f32 %v357, %v406
    %v415 = vmul.f32 %v359, %v407
    %v416 = vadd.f32 %v408, 0.2548296
    %v417 = vadd.f32 %v409, 0.2548296
    %v418 = vadd.f32 %v410, 0.2548296
    %v419 = vadd.f32 %v411, 0.2548296
    %v420 = vadd.f32 %v412, 0.2548296
    %v421 = vadd.f32 %v413, 0.2548296
    %v422 = vadd.f32 %v414, 0.2548296
    %v423 = vadd.f32 %v415, 0.2548296
    %v424 = vmul.f32 %v345, %v416
    %v425 = vmul.f32 %v347, %v417
    %v426 = vmul.f32 %v349, %v418
    %v427 = vmul.f32 %v351, %v419
    %v428 = vmul.f32 %v353, %v420
    %v429 = vmul.f32 %v355, %v421
    %v430 = vmul.f32 %v357, %v422
    %v431 = vmul.f32 %v359, %v423
    %v432 = vsub.f32 0.0, %v320
    %v433 = vsub.f32 0.0, %v321
    %v434 = vsub.f32 0.0, %v322
    %v435 = vsub.f32 0.0, %v323
    %v436 = vsub.f32 0.0, %v324
    %v437 = vsub.f32 0.0, %v325
    %v438 = vsub.f32 0.0, %v326
    %v439 = vsub.f32 0.0, %v327
    %v440 = vmul.f32 %v432, %v320
    %v441 = vmul.f32 %v433, %v321
    %v442 = vmul.f32 %v434, %v322
    %v443 = vmul.f32 %v435, %v323
    %v444 = vmul.f32 %v436, %v324
    %v445 = vmul.f32 %v437, %v325
    %v446 = vmul.f32 %v438, %v326
    %v447 = vmul.f32 %v439, %v327
    %v448 = vmul.f32 %v440, 1.442695
    %v449 = vpow.pop %v448
    %v450 = vmul.f32 %v441, 1.442695
    %v451 = vpow.pop %v450
    %v452 = vmul.f32 %v442, 1.442695
    %v453 = vpow.pop %v452
    %v454 = vmul.f32 %v443, 1.442695
    %v455 = vpow.pop %v454
    %v456 = vmul.f32 %v444, 1.442695
    %v457 = vpow.pop %v456
    %v458 = vmul.f32 %v445, 1.442695
    %v459 = vpow.pop %v458
    %v460 = vmul.f32 %v446, 1.442695
    %v461 = vpow.pop %v460
    %v462 = vmul.f32 %v447, 1.442695
    %v463 = vpow.pop %v462
    %v464 = vmul.f32 %v424, %v449
    %v465 = vmul.f32 %v425, %v451
    %v466 = vmul.f32 %v426, %v453
    %v467 = vmul.f32 %v427, %v455
    %v468 = vmul.f32 %v428, %v457
    %v469 = vmul.f32 %v429, %v459
    %v470 = vmul.f32 %v430, %v461
    %v471 = vmul.f32 %v431, %v463
    %v472 = vsub.f32 1.0, %v464
    %v473 = vsub.f32 1.0, %v465
    %v474 = vsub.f32 1.0, %v466
    %v475 = vsub.f32 1.0, %v467
    %v476 = vsub.f32 1.0, %v468
    %v477 = vsub.f32 1.0, %v469
    %v478 = vsub.f32 1.0, %v470
    %v479 = vsub.f32 1.0, %v471
    %vm480 = vcmp.ge.f32.partialorder %v312, 0.0
    %vm481 = vcmp.ge.f32.partialorder %v313, 0.0
    %vm482 = vcmp.ge.f32.partialorder %v314, 0.0
    %vm483 = vcmp.ge.f32.partialorder %v315, 0.0
    %vm484 = vcmp.ge.f32.partialorder %v316, 0.0
    %vm485 = vcmp.ge.f32.partialorder %v317, 0.0
    %vm486 = vcmp.ge.f32.partialorder %v318, 0.0
    %vm487 = vcmp.ge.f32.partialorder %v319, 0.0
    %v488 = vsub.f32 0.0, %v472
    %v489 = vsub.f32 0.0, %v473
    %v490 = vsub.f32 0.0, %v474
    %v491 = vsub.f32 0.0, %v475
    %v492 = vsub.f32 0.0, %v476
    %v493 = vsub.f32 0.0, %v477
    %v494 = vsub.f32 0.0, %v478
    %v495 = vsub.f32 0.0, %v479
    %v496 = vsel %vm480, %v472, %v488
    %v497 = vsel %vm481, %v473, %v489
    %v498 = vsel %vm482, %v474, %v490
    %v499 = vsel %vm483, %v475, %v491
    %v500 = vsel %vm484, %v476, %v492
    %v501 = vsel %vm485, %v477, %v493
    %v502 = vsel %vm486, %v478, %v494
    %v503 = vsel %vm487, %v479, %v495
    %v504 = vadd.f32 %v496, 1.0
    %v505 = vadd.f32 %v497, 1.0
    %v506 = vadd.f32 %v498, 1.0
    %v507 = vadd.f32 %v499, 1.0
    %v508 = vadd.f32 %v500, 1.0
    %v509 = vadd.f32 %v501, 1.0
    %v510 = vadd.f32 %v502, 1.0
    %v511 = vadd.f32 %v503, 1.0
    %v512 = vmul.f32 %v304, %v504
    %v513 = vmul.f32 %v305, %v505
    %v514 = vmul.f32 %v306, %v506
    %v515 = vmul.f32 %v307, %v507
    %v516 = vmul.f32 %v308, %v508
    %v517 = vmul.f32 %v309, %v509
    %v518 = vmul.f32 %v310, %v510
    %v519 = vmul.f32 %v311, %v511
    %v520 = vld [vmem:[#allocation7] sm:$0xff]
    %v521 = vld [vmem:[#allocation7 + $0x8] sm:$0xff]
    %v522 = vld [vmem:[#allocation7 + $0x10] sm:$0xff]
    %v523 = vld [vmem:[#allocation7 + $0x18] sm:$0xff]
    %v524 = vld [vmem:[#allocation7 + $0x20] sm:$0xff]
    %v525 = vld [vmem:[#allocation7 + $0x28] sm:$0xff]
    %v526 = vld [vmem:[#allocation7 + $0x30] sm:$0xff]
    %v527 = vld [vmem:[#allocation7 + $0x38] sm:$0xff]
    %v528 = vld [vmem:[#allocation7 + $0x40] sm:$0xff]
    %v529 = vld [vmem:[#allocation7 + $0x48] sm:$0xff]
    %v530 = vld [vmem:[#allocation7 + $0x50] sm:$0xff]
    %v531 = vld [vmem:[#allocation7 + $0x58] sm:$0xff]
    %v532 = vld [vmem:[#allocation7 + $0x60] sm:$0xff]
    %v533 = vld [vmem:[#allocation7 + $0x68] sm:$0xff]
    %v534 = vld [vmem:[#allocation7 + $0x70] sm:$0xff]
    %v535 = vld [vmem:[#allocation7 + $0x78] sm:$0xff]
    %v536 = vld [vmem:[#allocation7 + $0x80] sm:$0xff]
    %v537 = vld [vmem:[#allocation7 + $0x88] sm:$0xff]
    %v538 = vld [vmem:[#allocation7 + $0x90] sm:$0xff]
    %v539 = vld [vmem:[#allocation7 + $0x98] sm:$0xff]
    %v540 = vld [vmem:[#allocation7 + $0xa0] sm:$0xff]
    %v541 = vld [vmem:[#allocation7 + $0xa8] sm:$0xff]
    %v542 = vld [vmem:[#allocation7 + $0xb0] sm:$0xff]
    %v543 = vld [vmem:[#allocation7 + $0xb8] sm:$0xff]
    %v544 = vld [vmem:[#allocation7 + $0xc0] sm:$0xff]
    %v545 = vld [vmem:[#allocation7 + $0xc8] sm:$0xff]
    %v546 = vld [vmem:[#allocation7 + $0xd0] sm:$0xff]
    %v547 = vld [vmem:[#allocation7 + $0xd8] sm:$0xff]
    %v548 = vld [vmem:[#allocation7 + $0xe0] sm:$0xff]
    %v549 = vld [vmem:[#allocation7 + $0xe8] sm:$0xff]
    %v550 = vld [vmem:[#allocation7 + $0xf0] sm:$0xff]
    %v551 = vld [vmem:[#allocation7 + $0xf8] sm:$0xff]
    %v552 = vld [vmem:[#allocation7 + $0x100] sm:$0xff]
    %v553 = vld [vmem:[#allocation7 + $0x108] sm:$0xff]
    %v554 = vld [vmem:[#allocation7 + $0x110] sm:$0xff]
    %v555 = vld [vmem:[#allocation7 + $0x118] sm:$0xff]
    %v556 = vld [vmem:[#allocation7 + $0x120] sm:$0xff]
    %v557 = vld [vmem:[#allocation7 + $0x128] sm:$0xff]
    %v558 = vld [vmem:[#allocation7 + $0x130] sm:$0xff]
    %v559 = vld [vmem:[#allocation7 + $0x138] sm:$0xff]
    %v560 = vld [vmem:[#allocation7 + $0x140] sm:$0xff]
    %v561 = vld [vmem:[#allocation7 + $0x148] sm:$0xff]
    %v562 = vld [vmem:[#allocation7 + $0x150] sm:$0xff]
    %v563 = vld [vmem:[#allocation7 + $0x158] sm:$0xff]
    %v564 = vld [vmem:[#allocation7 + $0x160] sm:$0xff]
    %v565 = vld [vmem:[#allocation7 + $0x168] sm:$0xff]
    %v566 = vld [vmem:[#allocation7 + $0x170] sm:$0xff]
    %v567 = vld [vmem:[#allocation7 + $0x178] sm:$0xff]
    %v568 = vld [vmem:[#allocation7 + $0x180] sm:$0xff]
    %v569 = vld [vmem:[#allocation7 + $0x188] sm:$0xff]
    %v570 = vld [vmem:[#allocation7 + $0x190] sm:$0xff]
    %v571 = vld [vmem:[#allocation7 + $0x198] sm:$0xff]
    %v572 = vld [vmem:[#allocation7 + $0x1a0] sm:$0xff]
    %v573 = vld [vmem:[#allocation7 + $0x1a8] sm:$0xff]
    %v574 = vld [vmem:[#allocation7 + $0x1b0] sm:$0xff]
    %v575 = vld [vmem:[#allocation7 + $0x1b8] sm:$0xff]
    %v576 = vld [vmem:[#allocation7 + $0x1c0] sm:$0xff]
    %v577 = vld [vmem:[#allocation7 + $0x1c8] sm:$0xff]
    %v578 = vld [vmem:[#allocation7 + $0x1d0] sm:$0xff]
    %v579 = vld [vmem:[#allocation7 + $0x1d8] sm:$0xff]
    %v580 = vld [vmem:[#allocation7 + $0x1e0] sm:$0xff]
    %v581 = vld [vmem:[#allocation7 + $0x1e8] sm:$0xff]
    %v582 = vld [vmem:[#allocation7 + $0x1f0] sm:$0xff]
    %v583 = vld [vmem:[#allocation7 + $0x1f8] sm:$0xff]
    %v584 = vld [vmem:[%s4] sm:$0x1]
    %v586 = vlaneseq
    %v587 = vshrl.u32 %v586, 7
    %v588 = vsub.s32 0, %v587
    %v589 = vrot.slane %v584, %v588
    %591 = vmatprep.subr.mxu0 0.0
    %592 = vmatpush1.msra.mxu0 %v520
    %593 = vmatprep.subr.mxu0 0.0
    %594 = vmatpush1.msra.mxu0 %v521
    %595 = vmatprep.subr.mxu0 0.0
    %596 = vmatpush1.msra.mxu0 %v522
    %597 = vmatprep.subr.mxu0 0.0
    %598 = vmatpush1.msra.mxu0 %v523
    %599 = vmatprep.subr.mxu0 0.0
    %600 = vmatpush1.msra.mxu0 %v524
    %601 = vmatprep.subr.mxu0 0.0
    %602 = vmatpush1.msra.mxu0 %v525
    %603 = vmatprep.subr.mxu0 0.0
    %604 = vmatpush1.msra.mxu0 %v526
    %605 = vmatprep.subr.mxu0 0.0
    %606 = vmatpush1.msra.mxu0 %v527
    %607 = vmatprep.subr.mxu0 0.0
    %608 = vmatpush1.msra.mxu0 %v528
    %609 = vmatprep.subr.mxu0 0.0
    %610 = vmatpush1.msra.mxu0 %v529
    %611 = vmatprep.subr.mxu0 0.0
    %612 = vmatpush1.msra.mxu0 %v530
    %613 = vmatprep.subr.mxu0 0.0
    %614 = vmatpush1.msra.mxu0 %v531
    %615 = vmatprep.subr.mxu0 0.0
    %616 = vmatpush1.msra.mxu0 %v532
    %617 = vmatprep.subr.mxu0 0.0
    %618 = vmatpush1.msra.mxu0 %v533
    %619 = vmatprep.subr.mxu0 0.0
    %620 = vmatpush1.msra.mxu0 %v534
    %621 = vmatprep.subr.mxu0 0.0
    %622 = vmatpush1.msra.mxu0 %v535
    %623 = vmatprep.subr.mxu0 0.0
    %624 = vmatpush1.msra.mxu0 %v536
    %625 = vmatprep.subr.mxu0 0.0
    %626 = vmatpush1.msra.mxu0 %v537
    %627 = vmatprep.subr.mxu0 0.0
    %628 = vmatpush1.msra.mxu0 %v538
    %629 = vmatprep.subr.mxu0 0.0
    %630 = vmatpush1.msra.mxu0 %v539
    %631 = vmatprep.subr.mxu0 0.0
    %632 = vmatpush1.msra.mxu0 %v540
    %633 = vmatprep.subr.mxu0 0.0
    %634 = vmatpush1.msra.mxu0 %v541
    %635 = vmatprep.subr.mxu0 0.0
    %636 = vmatpush1.msra.mxu0 %v542
    %637 = vmatprep.subr.mxu0 0.0
    %638 = vmatpush1.msra.mxu0 %v543
    %639 = vmatprep.subr.mxu0 0.0
    %640 = vmatpush1.msra.mxu0 %v544
    %641 = vmatprep.subr.mxu0 0.0
    %642 = vmatpush1.msra.mxu0 %v545
    %643 = vmatprep.subr.mxu0 0.0
    %644 = vmatpush1.msra.mxu0 %v546
    %645 = vmatprep.subr.mxu0 0.0
    %646 = vmatpush1.msra.mxu0 %v547
    %647 = vmatprep.subr.mxu0 0.0
    %648 = vmatpush1.msra.mxu0 %v548
    %649 = vmatprep.subr.mxu0 0.0
    %650 = vmatpush1.msra.mxu0 %v549
    %651 = vmatprep.subr.mxu0 0.0
    %652 = vmatpush1.msra.mxu0 %v550
    %653 = vmatprep.subr.mxu0 0.0
    %654 = vmatpush1.msra.mxu0 %v551
    %655 = vmatprep.mubr.f32.mxu0 %v513
    %656 = vmatmul.mubr.f32.gmra.mrb[0].mxu0 %v512
    %v657 = vpop.f32.mrb[0].mxu0
    %v658 = vadd.f32 %v589, %v657
    %v659 = vpop.f32.mrb[0].mxu0
    %660 = vmatprep.mubr.f32.mxu0 %v517
    %661 = vmatmul.mubr.f32.gmra.mrb[0].mxu0 %v516
    %v662 = vpop.f32.mrb[0].mxu0
    %v663 = vadd.f32 %v589, %v662
    %v664 = vpop.f32.mrb[0].mxu0
    %665 = vdwg.mxu0
    %666 = vmatprep.subr.mxu0 0.0
    %667 = vmatpush1.msra.mxu0 %v552
    %668 = vmatprep.subr.mxu0 0.0
    %669 = vmatpush1.msra.mxu0 %v553
    %670 = vmatprep.subr.mxu0 0.0
    %671 = vmatpush1.msra.mxu0 %v554
    %672 = vmatprep.subr.mxu0 0.0
    %673 = vmatpush1.msra.mxu0 %v555
    %674 = vmatprep.subr.mxu0 0.0
    %675 = vmatpush1.msra.mxu0 %v556
    %676 = vmatprep.subr.mxu0 0.0
    %677 = vmatpush1.msra.mxu0 %v557
    %678 = vmatprep.subr.mxu0 0.0
    %679 = vmatpush1.msra.mxu0 %v558
    %680 = vmatprep.subr.mxu0 0.0
    %681 = vmatpush1.msra.mxu0 %v559
    %682 = vmatprep.subr.mxu0 0.0
    %683 = vmatpush1.msra.mxu0 %v560
    %684 = vmatprep.subr.mxu0 0.0
    %685 = vmatpush1.msra.mxu0 %v561
    %686 = vmatprep.subr.mxu0 0.0
    %687 = vmatpush1.msra.mxu0 %v562
    %688 = vmatprep.subr.mxu0 0.0
    %689 = vmatpush1.msra.mxu0 %v563
    %690 = vmatprep.subr.mxu0 0.0
    %691 = vmatpush1.msra.mxu0 %v564
    %692 = vmatprep.subr.mxu0 0.0
    %693 = vmatpush1.msra.mxu0 %v565
    %694 = vmatprep.subr.mxu0 0.0
    %695 = vmatpush1.msra.mxu0 %v566
    %696 = vmatprep.subr.mxu0 0.0
    %697 = vmatpush1.msra.mxu0 %v567
    %698 = vmatprep.subr.mxu0 0.0
    %699 = vmatpush1.msra.mxu0 %v568
    %700 = vmatprep.subr.mxu0 0.0
    %701 = vmatpush1.msra.mxu0 %v569
    %702 = vmatprep.subr.mxu0 0.0
    %703 = vmatpush1.msra.mxu0 %v570
    %704 = vmatprep.subr.mxu0 0.0
    %705 = vmatpush1.msra.mxu0 %v571
    %706 = vmatprep.subr.mxu0 0.0
    %707 = vmatpush1.msra.mxu0 %v572
    %708 = vmatprep.subr.mxu0 0.0
    %709 = vmatpush1.msra.mxu0 %v573
    %710 = vmatprep.subr.mxu0 0.0
    %711 = vmatpush1.msra.mxu0 %v574
    %712 = vmatprep.subr.mxu0 0.0
    %713 = vmatpush1.msra.mxu0 %v575
    %714 = vmatprep.subr.mxu0 0.0
    %715 = vmatpush1.msra.mxu0 %v576
    %716 = vmatprep.subr.mxu0 0.0
    %717 = vmatpush1.msra.mxu0 %v577
    %718 = vmatprep.subr.mxu0 0.0
    %719 = vmatpush1.msra.mxu0 %v578
    %720 = vmatprep.subr.mxu0 0.0
    %721 = vmatpush1.msra.mxu0 %v579
    %722 = vmatprep.subr.mxu0 0.0
    %723 = vmatpush1.msra.mxu0 %v580
    %724 = vmatprep.subr.mxu0 0.0
    %725 = vmatpush1.msra.mxu0 %v581
    %726 = vmatprep.subr.mxu0 0.0
    %727 = vmatpush1.msra.mxu0 %v582
    %728 = vmatprep.subr.mxu0 0.0
    %729 = vmatpush1.msra.mxu0 %v583
    %730 = vmatprep.mubr.f32.mxu0 %v515
    %731 = vmatmul.mubr.f32.gmra.mrb[0].mxu0 %v514
    %v732 = vpop.f32.mrb[0].mxu0
    %v733 = vadd.f32 %v658, %v732
    %v734 = vpop.f32.mrb[0].mxu0
    %735 = vmatprep.mubr.f32.mxu0 %v519
    %736 = vmatmul.mubr.f32.gmra.mrb[0].mxu0 %v518
    %v737 = vpop.f32.mrb[0].mxu0
    %v738 = vadd.f32 %v663, %v737
    %v739 = vpop.f32.mrb[0].mxu0
    %740 = vdwg.mxu0
    %741 = vst [vmem:[#allocation8] sm:$0xff] %v733
    %742 = vst [vmem:[#allocation8 + $0x8] sm:$0xff] %v738
    // Predicated region
    $region34: #{tpu_custom_call.1} parent=1 // pred_check
      _
    $region35: #{tpu_custom_call.1} parent=1 // pred_check_branch
      %744 = sbr.rel (0) target = $region37
    $region36: #{tpu_custom_call.1} parent=1 // pred_region
      %s746 = ssub.s32 256, 256
      %747 = vsyncadd [#allocation4], %s746
      %s748 = sshll.u32 [#allocation8], 4
      %s749 = int_to_ptr.vmem [resolvable:$true] %s748
      %754 = dma.vmem_to_hbm [thread:$0]  %s749, 256, %s5, [#allocation4], 128, 128, 8
    $region37: #{tpu_custom_call.1} parent=1 // pred_fallthru
      _
    // Predicated region
    $region38: #{tpu_custom_call.1} parent=1 // pred_check
      _
    $region39: #{tpu_custom_call.1} parent=1 // pred_check_branch
      %756 = sbr.rel (0) target = $region41
    $region40: #{tpu_custom_call.1} parent=1 // pred_region
      %757 = dma.done [#allocation4], 256
    $region41: #{tpu_custom_call.1} parent=1 // pred_fallthru
      _
    %758 = vsyncpa [#allocation3], 1
    %759 = vsyncpa [#allocation6], 1
    %760 = vsyncpa [#allocation4], 1

</llo_original>
